<compile_context>
chip_gen: v7x
topology: tpu7x:2x2x1
jax: 0.10.0
libtpu: 0.0.40
codegen_flags: <defaults>
</compile_context>

<pallas_src>
import functools

import jax
import jax.numpy as jnp
from jax import lax
from jax.experimental import pallas as pl
from jax.experimental.pallas import tpu as pltpu

BN_EPS = 1e-5        # torch.nn.BatchNorm1d default eps
L2_EPS = 1e-12       # torch F.normalize default eps
_SQRT_2 = 1.4142135623730951

# Conservative scoped-VMEM request: fits under v7x's 64 MiB physical VMEM and
# comfortably under v5e/v6e's 128 MiB, while exceeding the 32 MiB default.
_VMEM_LIMIT_BYTES = 48 * 1024 * 1024


# ---------------------------------------------------------------------------
# Elementwise helpers (Mosaic-friendly: exp / tanh / abs / where / rsqrt only)
# ---------------------------------------------------------------------------
def _erf(x):
    # Abramowitz & Stegun 7.1.26 polynomial, |err| < 1.5e-7 (~f32 resolution),
    # so this reproduces exact (erf-based) torch nn.GELU() semantics.
    p = 0.3275911
    a1, a2, a3, a4, a5 = (0.254829592, -0.284496736, 1.421413741,
                          -1.453152027, 1.061405429)
    ax = jnp.abs(x)
    t = 1.0 / (1.0 + p * ax)
    poly = ((((a5 * t + a4) * t + a3) * t + a2) * t + a1) * t
    y = 1.0 - poly * jnp.exp(-ax * ax)
    return jnp.where(x >= 0, y, -y)


def _gelu_exact(x):
    return 0.5 * x * (1.0 + _erf(x / _SQRT_2))


def _gelu_tanh(x):
    # tanh approximation: transcendental lands on the EUP slot, few VALU ops.
    c = 0.7978845608028654  # sqrt(2/pi)
    return 0.5 * x * (1.0 + jnp.tanh(c * (x + 0.044715 * x * x * x)))


def _clamp_tile(n, t):
    """If the array extent is smaller than the requested tile, use the full
    extent (always legal as a block dim); otherwise use the (8-/128-multiple)
    requested tile and let Pallas mask the boundary block."""
    return n if n <= t else t


# ---------------------------------------------------------------------------
# Kernel 1: 3-layer MLP (Linear->GELU->Linear->GELU->Linear) + L2 normalize
# Row-tiled; weights resident in VMEM.
# ---------------------------------------------------------------------------
def _mlp_norm_kernel(x_ref, w1_ref, b1_ref, w2_ref, b2_ref, w3_ref, b3_ref,
                     o_ref, *, use_tanh_gelu):
    gelu = _gelu_tanh if use_tanh_gelu else _gelu_exact
    cd = w2_ref.dtype  # compute (MXU input) dtype

    h = jnp.dot(x_ref[...], w1_ref[...],
                preferred_element_type=jnp.float32) + b1_ref[...]
    h = gelu(h).astype(cd)
    h = jnp.dot(h, w2_ref[...],
                preferred_element_type=jnp.float32) + b2_ref[...]
    h = gelu(h).astype(cd)
    z = jnp.dot(h, w3_ref[...],
                preferred_element_type=jnp.float32) + b3_ref[...]

    # F.normalize(p=2, dim=-1): x / max(||x||_2, eps)  ==  x * rsqrt(max(ssq, eps^2))
    ssq = jnp.sum(z * z, axis=-1, keepdims=True)
    inv = lax.rsqrt(jnp.maximum(ssq, L2_EPS * L2_EPS))
    o_ref[...] = (z * inv).astype(o_ref.dtype)


def mlp_bottleneck(x2d, params, *, compute_dtype=jnp.bfloat16, tm=None,
                   use_tanh_gelu=True, vmem_limit_bytes=_VMEM_LIMIT_BYTES):
    rows, in_dim = x2d.shape
    hidden = params["w1"].shape[0]
    bott = params["w3"].shape[0]
    cd = compute_dtype

    if tm is None:
        # Budget (v7x, 64 MiB): resident weights + double-buffered row tiles.
        tm = 512 if cd == jnp.bfloat16 else 256
    tm = _clamp_tile(rows, tm)
    grid = (pl.cdiv(rows, tm),)

    args = (
        x2d.astype(cd),
        params["w1"].T.astype(cd), params["b1"].reshape(1, -1).astype(jnp.float32),
        params["w2"].T.astype(cd), params["b2"].reshape(1, -1).astype(jnp.float32),
        params["w3"].T.astype(cd), params["b3"].reshape(1, -1).astype(jnp.float32),
    )

    def resident(shape):
        return pl.BlockSpec(shape, lambda i: (0,) * len(shape))

    flops = 2 * rows * (in_dim * hidden + hidden * hidden + hidden * bott)
    transcendentals = 2 * rows * hidden  # two GELUs over the hidden dim
    bytes_accessed = int(
        (x2d.size + rows * bott) * jnp.dtype(cd).itemsize
        + sum(int(a.size) * jnp.dtype(a.dtype).itemsize for a in args[1:]))

    kernel = functools.partial(_mlp_norm_kernel, use_tanh_gelu=use_tanh_gelu)

    return pl.pallas_call(
        kernel,
        out_shape=jax.ShapeDtypeStruct((rows, bott), cd),
        grid=grid,
        in_specs=[pl.BlockSpec((tm, in_dim), lambda i: (i, 0))]
                 + [resident(a.shape) for a in args[1:]],
        out_specs=pl.BlockSpec((tm, bott), lambda i: (i, 0)),
        compiler_params=pltpu.CompilerParams(
            dimension_semantics=("parallel",),
            vmem_limit_bytes=vmem_limit_bytes),
        cost_estimate=pl.CostEstimate(flops=int(flops),
                                      transcendentals=int(transcendentals),
                                      bytes_accessed=bytes_accessed),
    )(*args)


# ---------------------------------------------------------------------------
# Kernel 2a: fold weight-norm column normalization (+ BN scale) into the weight
#   nn.utils.weight_norm with weight_g == 1: row i of W is v_i / ||v_i||_2
#   eval BatchNorm1d(affine=False):          y -> (y - mean) / sqrt(var + eps)
#   -> W_prep[:, j] = v_j^T / ||v_j||_2 * inv_std[j]   (done once, not per tile)
# ---------------------------------------------------------------------------
def _wn_prep_kernel(vt_ref, inv_std_ref, o_ref):
    vt = vt_ref[...].astype(jnp.float32)                 # (K, tn)
    col_inv = lax.rsqrt(jnp.sum(vt * vt, axis=0, keepdims=True))
    o_ref[...] = (vt * (col_inv * inv_std_ref[...])).astype(o_ref.dtype)


# ---------------------------------------------------------------------------
# Kernel 2b: tiled matmul + BN shift (rows x out grid, both axes parallel)
# ---------------------------------------------------------------------------
def _wn_matmul_kernel(x_ref, w_ref, beta_ref, o_ref):
    y = jnp.dot(x_ref[...], w_ref[...], preferred_element_type=jnp.float32)
    o_ref[...] = (y + beta_ref[...]).astype(o_ref.dtype)


def wn_linear_bn(x2d, v, *, apply_bn=True, bn_mean=None, bn_var=None,
                 compute_dtype=jnp.bfloat16, out_dtype=jnp.float32,
                 tr=None, tn=512, vmem_limit_bytes=_VMEM_LIMIT_BYTES):
    rows, k = x2d.shape
    out_dim = v.shape[0]
    cd = compute_dtype

    # TODO(synk): PyTorch train-mode BatchNorm batch statistics (and BatchNorm1d
    # applied to a 3-D patch tensor, which is shape-incompatible in torch; the
    # original iBOT repo uses last_norm=None) have no clean static equivalent;
    # we model eval-mode BN with running stats (default mean=0, var=1).
    if apply_bn:
        if bn_mean is None:
            bn_mean = jnp.zeros((out_dim,), jnp.float32)
        if bn_var is None:
            bn_var = jnp.ones((out_dim,), jnp.float32)
        inv_std = (1.0 / jnp.sqrt(bn_var + BN_EPS)).reshape(1, out_dim)
        beta = (-bn_mean.reshape(1, out_dim) * inv_std).astype(jnp.float32)
    else:
        inv_std = jnp.ones((1, out_dim), jnp.float32)
        beta = jnp.zeros((1, out_dim), jnp.float32)
    inv_std = inv_std.astype(jnp.float32)

    tn = _clamp_tile(out_dim, tn)
    if tr is None:
        tr = 512 if cd == jnp.bfloat16 else 256
    tr = _clamp_tile(rows, tr)

    vt = v.T.astype(jnp.float32)                          # (K, out_dim)

    # Step 1: prep the folded weight once (not re-done per row tile).
    w_prep = pl.pallas_call(
        _wn_prep_kernel,
        out_shape=jax.ShapeDtypeStruct((k, out_dim), cd),
        grid=(pl.cdiv(out_dim, tn),),
        in_specs=[pl.BlockSpec((k, tn), lambda j: (0, j)),
                  pl.BlockSpec((1, tn), lambda j: (0, j))],
        out_specs=pl.BlockSpec((k, tn), lambda j: (0, j)),
        compiler_params=pltpu.CompilerParams(
            dimension_semantics=("parallel",)),
    )(vt, inv_std)

    # Step 2: (rows, out) tiled matmul + BN shift; both grid axes parallel
    # (megacore-friendly on v7x), wide lane-dense output tiles.
    flops = 2 * rows * k * out_dim
    bytes_accessed = int(rows * k * jnp.dtype(cd).itemsize
                         + k * out_dim * jnp.dtype(cd).itemsize
                         + rows * out_dim * jnp.dtype(out_dtype).itemsize)

    return pl.pallas_call(
        _wn_matmul_kernel,
        out_shape=jax.ShapeDtypeStruct((rows, out_dim), out_dtype),
        grid=(pl.cdiv(rows, tr), pl.cdiv(out_dim, tn)),
        in_specs=[pl.BlockSpec((tr, k), lambda i, j: (i, 0)),
                  pl.BlockSpec((k, tn), lambda i, j: (0, j)),
                  pl.BlockSpec((1, tn), lambda i, j: (0, j))],
        out_specs=pl.BlockSpec((tr, tn), lambda i, j: (i, j)),
        compiler_params=pltpu.CompilerParams(
            dimension_semantics=("parallel", "parallel"),
            vmem_limit_bytes=vmem_limit_bytes),
        cost_estimate=pl.CostEstimate(flops=int(flops), transcendentals=0,
                                      bytes_accessed=bytes_accessed),
    )(x2d.astype(cd), w_prep, beta)


# ---------------------------------------------------------------------------
# Full iBOTHead forward
# ---------------------------------------------------------------------------
def ibot_head_forward(x, params, *, compute_dtype=jnp.bfloat16,
                      use_tanh_gelu=True, out_dtype=jnp.float32,
                      mlp_tm=None, wn_tr=None, wn_tn=512):
    """x: (B, N, in_dim) tokens (1 CLS + N-1 patches) -> (x1 (B,out),
    x2 (B,N-1,patch_out)).  2-D input follows the DINOHead path (no BN)."""
    if x.ndim == 2:
        z = mlp_bottleneck(x, params, compute_dtype=compute_dtype,
                           tm=mlp_tm, use_tanh_gelu=use_tanh_gelu)
        return wn_linear_bn(z, params["v_last"], apply_bn=False,
                            compute_dtype=compute_dtype, out_dtype=out_dtype,
                            tr=wn_tr, tn=wn_tn)

    b, n, d = x.shape
    z = mlp_bottleneck(x.reshape(b * n, d), params,
                       compute_dtype=compute_dtype, tm=mlp_tm,
                       use_tanh_gelu=use_tanh_gelu)        # (B*N, bottleneck)
    z = z.reshape(b, n, -1)
    cls_tok = z[:, 0]                                      # (B, bottleneck)
    patches = z[:, 1:].reshape(b * (n - 1), -1)            # (B*(N-1), bottleneck)

    x1 = wn_linear_bn(cls_tok, params["v_last"],
                      compute_dtype=compute_dtype, out_dtype=out_dtype,
                      tr=wn_tr, tn=wn_tn)                  # (B, out_dim)
    x2 = wn_linear_bn(patches, params["v_last2"],
                      compute_dtype=compute_dtype, out_dtype=out_dtype,
                      tr=wn_tr, tn=wn_tn)                  # (B*(N-1), patch_out)
    return x1, x2.reshape(b, n - 1, -1)


# ---------------------------------------------------------------------------
# Deterministic parameter init (mirrors the module's __init__ shapes)
# ---------------------------------------------------------------------------
def init_params(key, in_dim, hidden, bott, out_dim, patch_out_dim):
    ks = jax.random.split(key, 5)

    def trunc(k, shape):   # trunc_normal_(std=0.02), bias = 0
        return 0.02 * jax.random.truncated_normal(k, -2.0, 2.0, shape,
                                                  jnp.float32)

    def lin_default(k, shape, fan_in):   # default nn.Linear init for weight_v
        bound = 1.0 / (fan_in ** 0.5)
        return jax.random.uniform(k, shape, jnp.float32, -bound, bound)

    return dict(
        w1=trunc(ks[0], (hidden, in_dim)), b1=jnp.zeros((hidden,), jnp.float32),
        w2=trunc(ks[1], (hidden, hidden)), b2=jnp.zeros((hidden,), jnp.float32),
        w3=trunc(ks[2], (bott, hidden)),   b3=jnp.zeros((bott,), jnp.float32),
        v_last=lin_default(ks[3], (out_dim, bott), bott),          # last_layer.weight_v
        v_last2=lin_default(ks[4], (patch_out_dim, bott), bott),   # last_layer2.weight_v
    )


# ---------------------------------------------------------------------------
# Pure-JAX reference (exact erf GELU, eval-mode BN with init running stats)
# ---------------------------------------------------------------------------
def ref_forward(x, p):
    gelu = lambda v: 0.5 * v * (1.0 + jax.scipy.special.erf(v / _SQRT_2))
    h = gelu(x @ p["w1"].T + p["b1"])
    h = gelu(h @ p["w2"].T + p["b2"])
    z = h @ p["w3"].T + p["b3"]
    z = z / jnp.maximum(jnp.linalg.norm(z, axis=-1, keepdims=True), L2_EPS)
    wn = lambda v: v / jnp.linalg.norm(v, axis=1, keepdims=True)
    bn = 1.0 / jnp.sqrt(1.0 + BN_EPS)
    x1 = (z[:, 0] @ wn(p["v_last"]).T) * bn
    x2 = (z[:, 1:] @ wn(p["v_last2"]).T) * bn
    return x1, x2


if __name__ == "__main__":
    # small shapes: batch=2, tokens=8 (1 CLS + 7 patches), in_dim=32,
    # hidden=64, bottleneck=128, out_dim=256, patch_out_dim=256
    B, N, IN_DIM = 2, 8, 32
    HIDDEN, BOTT = 64, 128
    OUT_DIM, PATCH_OUT_DIM = 256, 256

    key = jax.random.PRNGKey(0)
    kx, kp = jax.random.split(key)
    x = jax.random.normal(kx, (B, N, IN_DIM), jnp.float32)
    params = init_params(kp, IN_DIM, HIDDEN, BOTT, OUT_DIM, PATCH_OUT_DIM)

    r1, r2 = ref_forward(x, params)

    # 1) Exact-parity config: f32 MXU inputs + exact-erf GELU.  Small tiles
    #    (tm=8, tr=8, tn=128) exercise the multi-step grids / boundary blocks.
    x1, x2 = jax.block_until_ready(ibot_head_forward(
        x, params, compute_dtype=jnp.float32, use_tanh_gelu=False,
        mlp_tm=8, wn_tr=8, wn_tn=128))
    assert x1.shape == (B, OUT_DIM) and x2.shape == (B, N - 1, PATCH_OUT_DIM)
    assert jnp.allclose(x1, r1, atol=2e-3, rtol=2e-3)
    assert jnp.allclose(x2, r2, atol=2e-3, rtol=2e-3)

    # 2) Fast config: bf16 MXU inputs (f32 accumulate) + tanh GELU.
    y1, y2 = jax.block_until_ready(ibot_head_forward(
        x, params, compute_dtype=jnp.bfloat16, use_tanh_gelu=True,
        mlp_tm=8, wn_tr=8, wn_tn=128))
    assert y1.shape == (B, OUT_DIM) and y2.shape == (B, N - 1, PATCH_OUT_DIM)
    assert jnp.allclose(y1, r1, atol=3e-2, rtol=3e-2)
    assert jnp.allclose(y2, r2, atol=3e-2, rtol=3e-2)

    print("KERNEL_OK")
</pallas_src>

<mosaic_0001>
module attributes {stable_mosaic.version = 11 : i64} {
  func.func @_mlp_norm_kernel(%arg0: i32, %arg1: memref<8x32xf32, #tpu.memory_space<vmem>>, %arg2: memref<32x64xf32, #tpu.memory_space<vmem>>, %arg3: memref<1x64xf32, #tpu.memory_space<vmem>>, %arg4: memref<64x64xf32, #tpu.memory_space<vmem>>, %arg5: memref<1x64xf32, #tpu.memory_space<vmem>>, %arg6: memref<64x128xf32, #tpu.memory_space<vmem>>, %arg7: memref<1x128xf32, #tpu.memory_space<vmem>>, %arg8: memref<8x128xf32, #tpu.memory_space<vmem>>) attributes {dimension_semantics = [#tpu.dimension_semantics<parallel>], iteration_bounds = array<i64: 2>, scalar_prefetch = 0 : i64, scratch_operands = 0 : i64, tpu.core_type = #tpu.core_type<tc>, window_params = [{transform_indices = @transform_0, window_bounds = array<i64: 8, 32>}, {pipeline_mode = #tpu.pipeline_mode<synchronous>, transform_indices = @transform_1, window_bounds = array<i64: 32, 64>}, {pipeline_mode = #tpu.pipeline_mode<synchronous>, transform_indices = @transform_2, window_bounds = array<i64: 1, 64>}, {pipeline_mode = #tpu.pipeline_mode<synchronous>, transform_indices = @transform_3, window_bounds = array<i64: 64, 64>}, {pipeline_mode = #tpu.pipeline_mode<synchronous>, transform_indices = @transform_4, window_bounds = array<i64: 1, 64>}, {pipeline_mode = #tpu.pipeline_mode<synchronous>, transform_indices = @transform_5, window_bounds = array<i64: 64, 128>}, {pipeline_mode = #tpu.pipeline_mode<synchronous>, transform_indices = @transform_6, window_bounds = array<i64: 1, 128>}, {transform_indices = @transform_7, window_bounds = array<i64: 8, 128>}]} {
    %c0 = arith.constant 0 : index
    %c0_0 = arith.constant 0 : index
    %0 = vector.load %arg1[%c0, %c0_0] : memref<8x32xf32, #tpu.memory_space<vmem>>, vector<8x32xf32>
    %c0_1 = arith.constant 0 : index
    %c0_2 = arith.constant 0 : index
    %1 = vector.load %arg2[%c0_1, %c0_2] : memref<32x64xf32, #tpu.memory_space<vmem>>, vector<32x64xf32>
    %cst = arith.constant dense<0.000000e+00> : vector<8x64xf32>
    %2 = tpu.matmul %0, %1, %cst {dimension_numbers = #tpu.dot_dimension_numbers<[1], [0], [0], [1], [0, 0, 1, 1], [], []>} : vector<8x32xf32>, vector<32x64xf32>, vector<8x64xf32> -> vector<8x64xf32>
    %c0_3 = arith.constant 0 : index
    %c0_4 = arith.constant 0 : index
    %3 = vector.load %arg3[%c0_3, %c0_4] : memref<1x64xf32, #tpu.memory_space<vmem>>, vector<1x64xf32>
    %4 = vector.broadcast %3 : vector<1x64xf32> to vector<8x64xf32>
    %5 = arith.addf %2, %4 : vector<8x64xf32>
    %cst_5 = arith.constant 5.000000e-01 : f32
    %6 = vector.broadcast %cst_5 : f32 to vector<8x64xf32>
    %7 = arith.mulf %6, %5 : vector<8x64xf32>
    %cst_6 = arith.constant 1.41421354 : f32
    %8 = vector.broadcast %cst_6 : f32 to vector<8x64xf32>
    %9 = arith.divf %5, %8 : vector<8x64xf32>
    %10 = math.absf %9 : vector<8x64xf32>
    %cst_7 = arith.constant 0.327591091 : f32
    %11 = vector.broadcast %cst_7 : f32 to vector<8x64xf32>
    %12 = arith.mulf %11, %10 : vector<8x64xf32>
    %cst_8 = arith.constant 1.000000e+00 : f32
    %13 = vector.broadcast %cst_8 : f32 to vector<8x64xf32>
    %14 = arith.addf %13, %12 : vector<8x64xf32>
    %cst_9 = arith.constant 1.000000e+00 : f32
    %15 = vector.broadcast %cst_9 : f32 to vector<8x64xf32>
    %16 = arith.divf %15, %14 : vector<8x64xf32>
    %cst_10 = arith.constant 1.06140542 : f32
    %17 = vector.broadcast %cst_10 : f32 to vector<8x64xf32>
    %18 = arith.mulf %17, %16 : vector<8x64xf32>
    %cst_11 = arith.constant -1.45315206 : f32
    %19 = vector.broadcast %cst_11 : f32 to vector<8x64xf32>
    %20 = arith.addf %18, %19 : vector<8x64xf32>
    %21 = arith.mulf %20, %16 : vector<8x64xf32>
    %cst_12 = arith.constant 1.42141378 : f32
    %22 = vector.broadcast %cst_12 : f32 to vector<8x64xf32>
    %23 = arith.addf %21, %22 : vector<8x64xf32>
    %24 = arith.mulf %23, %16 : vector<8x64xf32>
    %cst_13 = arith.constant -0.284496725 : f32
    %25 = vector.broadcast %cst_13 : f32 to vector<8x64xf32>
    %26 = arith.addf %24, %25 : vector<8x64xf32>
    %27 = arith.mulf %26, %16 : vector<8x64xf32>
    %cst_14 = arith.constant 0.254829586 : f32
    %28 = vector.broadcast %cst_14 : f32 to vector<8x64xf32>
    %29 = arith.addf %27, %28 : vector<8x64xf32>
    %30 = arith.mulf %29, %16 : vector<8x64xf32>
    %cst_15 = arith.constant 0.000000e+00 : f32
    %31 = vector.broadcast %cst_15 : f32 to vector<8x64xf32>
    %32 = arith.subf %31, %10 : vector<8x64xf32>
    %33 = arith.mulf %32, %10 : vector<8x64xf32>
    %34 = math.exp %33 : vector<8x64xf32>
    %35 = arith.mulf %30, %34 : vector<8x64xf32>
    %cst_16 = arith.constant 1.000000e+00 : f32
    %36 = vector.broadcast %cst_16 : f32 to vector<8x64xf32>
    %37 = arith.subf %36, %35 : vector<8x64xf32>
    %cst_17 = arith.constant 0.000000e+00 : f32
    %38 = vector.broadcast %cst_17 : f32 to vector<8x64xf32>
    %39 = arith.cmpf oge, %9, %38 : vector<8x64xf32>
    %cst_18 = arith.constant 0.000000e+00 : f32
    %40 = vector.broadcast %cst_18 : f32 to vector<8x64xf32>
    %41 = arith.subf %40, %37 : vector<8x64xf32>
    %42 = arith.select %39, %37, %41 : vector<8x64xi1>, vector<8x64xf32>
    %cst_19 = arith.constant 1.000000e+00 : f32
    %43 = vector.broadcast %cst_19 : f32 to vector<8x64xf32>
    %44 = arith.addf %43, %42 : vector<8x64xf32>
    %45 = arith.mulf %7, %44 : vector<8x64xf32>
    %c0_20 = arith.constant 0 : index
    %c0_21 = arith.constant 0 : index
    %46 = vector.load %arg4[%c0_20, %c0_21] : memref<64x64xf32, #tpu.memory_space<vmem>>, vector<64x64xf32>
    %cst_22 = arith.constant dense<0.000000e+00> : vector<8x64xf32>
    %47 = tpu.matmul %45, %46, %cst_22 {dimension_numbers = #tpu.dot_dimension_numbers<[1], [0], [0], [1], [0, 0, 1, 1], [], []>} : vector<8x64xf32>, vector<64x64xf32>, vector<8x64xf32> -> vector<8x64xf32>
    %c0_23 = arith.constant 0 : index
    %c0_24 = arith.constant 0 : index
    %48 = vector.load %arg5[%c0_23, %c0_24] : memref<1x64xf32, #tpu.memory_space<vmem>>, vector<1x64xf32>
    %49 = vector.broadcast %48 : vector<1x64xf32> to vector<8x64xf32>
    %50 = arith.addf %47, %49 : vector<8x64xf32>
    %cst_25 = arith.constant 5.000000e-01 : f32
    %51 = vector.broadcast %cst_25 : f32 to vector<8x64xf32>
    %52 = arith.mulf %51, %50 : vector<8x64xf32>
    %cst_26 = arith.constant 1.41421354 : f32
    %53 = vector.broadcast %cst_26 : f32 to vector<8x64xf32>
    %54 = arith.divf %50, %53 : vector<8x64xf32>
    %55 = math.absf %54 : vector<8x64xf32>
    %cst_27 = arith.constant 0.327591091 : f32
    %56 = vector.broadcast %cst_27 : f32 to vector<8x64xf32>
    %57 = arith.mulf %56, %55 : vector<8x64xf32>
    %cst_28 = arith.constant 1.000000e+00 : f32
    %58 = vector.broadcast %cst_28 : f32 to vector<8x64xf32>
    %59 = arith.addf %58, %57 : vector<8x64xf32>
    %cst_29 = arith.constant 1.000000e+00 : f32
    %60 = vector.broadcast %cst_29 : f32 to vector<8x64xf32>
    %61 = arith.divf %60, %59 : vector<8x64xf32>
    %cst_30 = arith.constant 1.06140542 : f32
    %62 = vector.broadcast %cst_30 : f32 to vector<8x64xf32>
    %63 = arith.mulf %62, %61 : vector<8x64xf32>
    %cst_31 = arith.constant -1.45315206 : f32
    %64 = vector.broadcast %cst_31 : f32 to vector<8x64xf32>
    %65 = arith.addf %63, %64 : vector<8x64xf32>
    %66 = arith.mulf %65, %61 : vector<8x64xf32>
    %cst_32 = arith.constant 1.42141378 : f32
    %67 = vector.broadcast %cst_32 : f32 to vector<8x64xf32>
    %68 = arith.addf %66, %67 : vector<8x64xf32>
    %69 = arith.mulf %68, %61 : vector<8x64xf32>
    %cst_33 = arith.constant -0.284496725 : f32
    %70 = vector.broadcast %cst_33 : f32 to vector<8x64xf32>
    %71 = arith.addf %69, %70 : vector<8x64xf32>
    %72 = arith.mulf %71, %61 : vector<8x64xf32>
    %cst_34 = arith.constant 0.254829586 : f32
    %73 = vector.broadcast %cst_34 : f32 to vector<8x64xf32>
    %74 = arith.addf %72, %73 : vector<8x64xf32>
    %75 = arith.mulf %74, %61 : vector<8x64xf32>
    %cst_35 = arith.constant 0.000000e+00 : f32
    %76 = vector.broadcast %cst_35 : f32 to vector<8x64xf32>
    %77 = arith.subf %76, %55 : vector<8x64xf32>
    %78 = arith.mulf %77, %55 : vector<8x64xf32>
    %79 = math.exp %78 : vector<8x64xf32>
    %80 = arith.mulf %75, %79 : vector<8x64xf32>
    %cst_36 = arith.constant 1.000000e+00 : f32
    %81 = vector.broadcast %cst_36 : f32 to vector<8x64xf32>
    %82 = arith.subf %81, %80 : vector<8x64xf32>
    %cst_37 = arith.constant 0.000000e+00 : f32
    %83 = vector.broadcast %cst_37 : f32 to vector<8x64xf32>
    %84 = arith.cmpf oge, %54, %83 : vector<8x64xf32>
    %cst_38 = arith.constant 0.000000e+00 : f32
    %85 = vector.broadcast %cst_38 : f32 to vector<8x64xf32>
    %86 = arith.subf %85, %82 : vector<8x64xf32>
    %87 = arith.select %84, %82, %86 : vector<8x64xi1>, vector<8x64xf32>
    %cst_39 = arith.constant 1.000000e+00 : f32
    %88 = vector.broadcast %cst_39 : f32 to vector<8x64xf32>
    %89 = arith.addf %88, %87 : vector<8x64xf32>
    %90 = arith.mulf %52, %89 : vector<8x64xf32>
    %c0_40 = arith.constant 0 : index
    %c0_41 = arith.constant 0 : index
    %91 = vector.load %arg6[%c0_40, %c0_41] : memref<64x128xf32, #tpu.memory_space<vmem>>, vector<64x128xf32>
    %cst_42 = arith.constant dense<0.000000e+00> : vector<8x128xf32>
    %92 = tpu.matmul %90, %91, %cst_42 {dimension_numbers = #tpu.dot_dimension_numbers<[1], [0], [0], [1], [0, 0, 1, 1], [], []>} : vector<8x64xf32>, vector<64x128xf32>, vector<8x128xf32> -> vector<8x128xf32>
    %c0_43 = arith.constant 0 : index
    %c0_44 = arith.constant 0 : index
    %93 = vector.load %arg7[%c0_43, %c0_44] : memref<1x128xf32, #tpu.memory_space<vmem>>, vector<1x128xf32>
    %94 = vector.broadcast %93 : vector<1x128xf32> to vector<8x128xf32>
    %95 = arith.addf %92, %94 : vector<8x128xf32>
    %96 = arith.mulf %95, %95 : vector<8x128xf32>
    %cst_45 = arith.constant dense<0.000000e+00> : vector<8xf32>
    %97 = vector.multi_reduction <add>, %96, %cst_45 [1] : vector<8x128xf32> to vector<8xf32>
    %98 = vector.shape_cast %97 : vector<8xf32> to vector<8x1xf32>
    %cst_46 = arith.constant 1.000000e-24 : f32
    %99 = vector.broadcast %cst_46 : f32 to vector<8x1xf32>
    %100 = arith.maximumf %98, %99 : vector<8x1xf32>
    %101 = math.rsqrt %100 : vector<8x1xf32>
    %102 = vector.broadcast %101 : vector<8x1xf32> to vector<8x128xf32>
    %103 = arith.mulf %95, %102 : vector<8x128xf32>
    %c0_47 = arith.constant 0 : index
    %c0_48 = arith.constant 0 : index
    %104 = vector.load %arg8[%c0_47, %c0_48] : memref<8x128xf32, #tpu.memory_space<vmem>>, vector<8x128xf32>
    tpu.vector_store %arg8[%c0_47, %c0_48], %103 {strides = array<i32>} : memref<8x128xf32, #tpu.memory_space<vmem>>, vector<8x128xf32>,
    return
  }
  func.func @transform_0(%arg0: i32) -> (i32, i32) {
    %c0_i32 = arith.constant 0 : i32
    %c0_i32_0 = arith.constant 0 : i32
    return %arg0, %c0_i32 : i32, i32
  }
  func.func @transform_1(%arg0: i32) -> (i32, i32) {
    %c0_i32 = arith.constant 0 : i32
    %c0_i32_0 = arith.constant 0 : i32
    %c0_i32_1 = arith.constant 0 : i32
    return %c0_i32, %c0_i32_0 : i32, i32
  }
  func.func @transform_2(%arg0: i32) -> (i32, i32) {
    %c0_i32 = arith.constant 0 : i32
    %c0_i32_0 = arith.constant 0 : i32
    %c0_i32_1 = arith.constant 0 : i32
    return %c0_i32, %c0_i32_0 : i32, i32
  }
  func.func @transform_3(%arg0: i32) -> (i32, i32) {
    %c0_i32 = arith.constant 0 : i32
    %c0_i32_0 = arith.constant 0 : i32
    %c0_i32_1 = arith.constant 0 : i32
    return %c0_i32, %c0_i32_0 : i32, i32
  }
  func.func @transform_4(%arg0: i32) -> (i32, i32) {
    %c0_i32 = arith.constant 0 : i32
    %c0_i32_0 = arith.constant 0 : i32
    %c0_i32_1 = arith.constant 0 : i32
    return %c0_i32, %c0_i32_0 : i32, i32
  }
  func.func @transform_5(%arg0: i32) -> (i32, i32) {
    %c0_i32 = arith.constant 0 : i32
    %c0_i32_0 = arith.constant 0 : i32
    %c0_i32_1 = arith.constant 0 : i32
    return %c0_i32, %c0_i32_0 : i32, i32
  }
  func.func @transform_6(%arg0: i32) -> (i32, i32) {
    %c0_i32 = arith.constant 0 : i32
    %c0_i32_0 = arith.constant 0 : i32
    %c0_i32_1 = arith.constant 0 : i32
    return %c0_i32, %c0_i32_0 : i32, i32
  }
  func.func @transform_7(%arg0: i32) -> (i32, i32) {
    %c0_i32 = arith.constant 0 : i32
    %c0_i32_0 = arith.constant 0 : i32
    return %arg0, %c0_i32 : i32, i32
  }
}

</mosaic_0001>

<llo_original>
// kernel: tpu_custom_call.1
$region0: #{tpu_custom_call.1}
  #allocation0 [shape = 'u32[]', space=smem, size = 0x4, offset = 0x4, fixed_abs, tag = 'smem constant byte address 0x4 - core index']
  #allocation1 [shape = 'u32[144,128]{1,0:T(1,128)}', space=vmem, size = 0x12000, scoped, tag = 'internal scratch']
  %s0 = inlined_call_operand.hbm [shape: f32[16,32], index: 0, kind: input, shape index: {}]
  %s1 = inlined_call_operand.hbm [shape: f32[32,64], index: 1, kind: input, shape index: {}]
  %s2 = inlined_call_operand.vmem [shape: f32[1,64], index: 2, kind: input, shape index: {}]
  %s3 = inlined_call_operand.hbm [shape: f32[64,64], index: 3, kind: input, shape index: {}]
  %s4 = inlined_call_operand.vmem [shape: f32[1,64], index: 4, kind: input, shape index: {}]
  %s5 = inlined_call_operand.hbm [shape: f32[64,128], index: 5, kind: input, shape index: {}]
  %s6 = inlined_call_operand.vmem [shape: f32[1,128], index: 6, kind: input, shape index: {}]
  %s7 = inlined_call_operand.hbm [shape: f32[16,128], index: 7, kind: output, shape index: {}]
  %s8 = sld [smem:[#allocation0]]
  $region77: #{tpu_custom_call.1} parent=0
    _
  %s10 = ssub.s32 1, %s8
  %s11 = scalar_select 0, %s10, %s8
  $region1: #{tpu_custom_call.1} parent=0
    #allocation2 [shape = 'u8[8192]{0}', space=vmem, size = 0x2000, scoped, tag = 'input window, operand 0']
    #allocation3 [shape = 's32[2]{0}', space=sflag, size = 0x8, scoped, tag = 'scoped memory for tpu_custom_call.1']
    #allocation4 [shape = 's32[2]{0}', space=sflag, size = 0x8, scoped, tag = 'scoped memory for tpu_custom_call.1']
    #allocation5 [shape = 'u8[16384]{0}', space=vmem, size = 0x4000, scoped, tag = 'input window, operand 1, single buffered']
    #allocation6 [shape = 's32[1]{0}', space=sflag, size = 0x4, scoped, tag = 'scoped memory for tpu_custom_call.1']
    #allocation7 [shape = 'u8[32768]{0}', space=vmem, size = 0x8000, scoped, tag = 'input window, operand 3, single buffered']
    #allocation8 [shape = 'u8[32768]{0}', space=vmem, size = 0x8000, scoped, tag = 'input window, operand 5, single buffered']
    #allocation9 [shape = 's32[1]{0}', space=sflag, size = 0x4, scoped, tag = 'scoped memory for tpu_custom_call.1']
    #allocation10 [shape = 'u8[8192]{0}', space=vmem, size = 0x2000, scoped, tag = 'output window, operand 0']
    %12 = vsyncpa [#allocation3], 0
    %s13 = scalar_lea.sflag [#allocation3], 1
    %14 = vsyncpa %s13, 0
    %15 = vsyncpa [#allocation6], 0
    %16 = vsyncpa [#allocation9], 0
    %17 = vsyncpa [#allocation4], 0
    %s18 = scalar_lea.sflag [#allocation4], 1
    %19 = vsyncpa %s18, 0
    loop: start=0, step=1, limit=4
    $region2: #{tpu_custom_call.1} parent=1 // loop_pre_header
      _
    $region3: #{tpu_custom_call.1} parent=1 // loop_header
      %s21 = sphi 0, %s25
      %p22 = scmp.ge.s32.totalorder %s21, 4
      %s31 = sphi 0, %s33
      %s34 = sphi 0, %s31
      %s35 = sphi 0, %s34
      %s51 = sphi 0, %s35
      %s55 = sphi 0, %s55
      %s57 = sphi 0, %s55
      %s58 = sphi 0, %s57
      %s72 = sphi 0, %s58
      %s76 = sphi 0, %s76
      %s78 = sphi 0, %s76
      %s79 = sphi 0, %s78
      %s93 = sphi 0, %s79
      %s97 = sphi 0, %s97
      %s99 = sphi 0, %s97
      %s100 = sphi 0, %s99
      %s114 = sphi 0, %s100
      %s118 = sphi 0, %s118
      %s120 = sphi 0, %s118
      %s121 = sphi 0, %s120
      %s135 = sphi 0, %s121
      %s139 = sphi 0, %s139
      %s141 = sphi 0, %s139
      %s142 = sphi 0, %s141
      %s156 = sphi 0, %s142
      %s160 = sphi 0, %s160
      %s162 = sphi 0, %s160
      %s163 = sphi 0, %s162
      %s177 = sphi 0, %s163
      %s183 = sphi 0, %s185
      %s186 = sphi 0, %s183
      %s187 = sphi 0, %s186
      %s203 = sphi 0, %s187
    $region4: #{tpu_custom_call.1} parent=1 // loop_header_branch
      %24 = sbr.rel (%p22) target = $region8
    $region5: #{tpu_custom_call.1} parent=1 // loop_body
      %s26 = ssub.s32 %s21, 1
      %s27 = ssub.s32 %s21, 2
      %s28 = sadd.s32 %s21, 1
      %s29 = ssub.s32 %s21, %s28
      %p30 = scmp.eq.s32.totalorder %s29, 0
      %s32 = sadd.s32 %s31, 1
      %s33 = scalar_select %p30, %s31, %s32
      %p36 = pneg %p30
      %p37 = scmp.eq.s32.totalorder %s21, 1
      %p38 = por %p36, %p37
      %p39 = scmp.ne.s32.totalorder %s31, %s34
      %p40 = scmp.eq.s32.totalorder %s21, 0
      %p41 = por %p39, %p40
      %p42 = scmp.ne.s32.totalorder %s31, %s34
      %p43 = scmp.eq.s32.totalorder %s26, 1
      %p44 = por %p42, %p43
      %p45 = scmp.ne.s32.totalorder %s34, %s35
      %p46 = scmp.eq.s32.totalorder %s26, 0
      %p47 = por %p45, %p46
      %p48 = scmp.ne.s32.totalorder %s34, %s35
      %p49 = scmp.eq.s32.totalorder %s27, 1
      %p50 = por %p48, %p49
      %p52 = scmp.ne.s32.totalorder %s35, %s51
      %p53 = scmp.eq.s32.totalorder %s27, 0
      %p54 = por %p52, %p53
      %s56 = sadd.s32 %s55, 1
      %p59 = scmp.eq.s32.totalorder %s21, 1
      %p60 = scmp.ne.s32.totalorder %s55, %s57
      %p61 = scmp.eq.s32.totalorder %s21, 0
      %p62 = por %p60, %p61
      %p63 = scmp.ne.s32.totalorder %s55, %s57
      %p64 = scmp.eq.s32.totalorder %s26, 1
      %p65 = por %p63, %p64
      %p66 = scmp.ne.s32.totalorder %s57, %s58
      %p67 = scmp.eq.s32.totalorder %s26, 0
      %p68 = por %p66, %p67
      %p69 = scmp.ne.s32.totalorder %s57, %s58
      %p70 = scmp.eq.s32.totalorder %s27, 1
      %p71 = por %p69, %p70
      %p73 = scmp.ne.s32.totalorder %s58, %s72
      %p74 = scmp.eq.s32.totalorder %s27, 0
      %p75 = por %p73, %p74
      %s77 = sadd.s32 %s76, 1
      %p80 = scmp.eq.s32.totalorder %s21, 1
      %p81 = scmp.ne.s32.totalorder %s76, %s78
      %p82 = scmp.eq.s32.totalorder %s21, 0
      %p83 = por %p81, %p82
      %p84 = scmp.ne.s32.totalorder %s76, %s78
      %p85 = scmp.eq.s32.totalorder %s26, 1
      %p86 = por %p84, %p85
      %p87 = scmp.ne.s32.totalorder %s78, %s79
      %p88 = scmp.eq.s32.totalorder %s26, 0
      %p89 = por %p87, %p88
      %p90 = scmp.ne.s32.totalorder %s78, %s79
      %p91 = scmp.eq.s32.totalorder %s27, 1
      %p92 = por %p90, %p91
      %p94 = scmp.ne.s32.totalorder %s79, %s93
      %p95 = scmp.eq.s32.totalorder %s27, 0
      %p96 = por %p94, %p95
      %s98 = sadd.s32 %s97, 1
      %p101 = scmp.eq.s32.totalorder %s21, 1
      %p102 = scmp.ne.s32.totalorder %s97, %s99
      %p103 = scmp.eq.s32.totalorder %s21, 0
      %p104 = por %p102, %p103
      %p105 = scmp.ne.s32.totalorder %s97, %s99
      %p106 = scmp.eq.s32.totalorder %s26, 1
      %p107 = por %p105, %p106
      %p108 = scmp.ne.s32.totalorder %s99, %s100
      %p109 = scmp.eq.s32.totalorder %s26, 0
      %p110 = por %p108, %p109
      %p111 = scmp.ne.s32.totalorder %s99, %s100
      %p112 = scmp.eq.s32.totalorder %s27, 1
      %p113 = por %p111, %p112
      %p115 = scmp.ne.s32.totalorder %s100, %s114
      %p116 = scmp.eq.s32.totalorder %s27, 0
      %p117 = por %p115, %p116
      %s119 = sadd.s32 %s118, 1
      %p122 = scmp.eq.s32.totalorder %s21, 1
      %p123 = scmp.ne.s32.totalorder %s118, %s120
      %p124 = scmp.eq.s32.totalorder %s21, 0
      %p125 = por %p123, %p124
      %p126 = scmp.ne.s32.totalorder %s118, %s120
      %p127 = scmp.eq.s32.totalorder %s26, 1
      %p128 = por %p126, %p127
      %p129 = scmp.ne.s32.totalorder %s120, %s121
      %p130 = scmp.eq.s32.totalorder %s26, 0
      %p131 = por %p129, %p130
      %p132 = scmp.ne.s32.totalorder %s120, %s121
      %p133 = scmp.eq.s32.totalorder %s27, 1
      %p134 = por %p132, %p133
      %p136 = scmp.ne.s32.totalorder %s121, %s135
      %p137 = scmp.eq.s32.totalorder %s27, 0
      %p138 = por %p136, %p137
      %s140 = sadd.s32 %s139, 1
      %p143 = scmp.eq.s32.totalorder %s21, 1
      %p144 = scmp.ne.s32.totalorder %s139, %s141
      %p145 = scmp.eq.s32.totalorder %s21, 0
      %p146 = por %p144, %p145
      %p147 = scmp.ne.s32.totalorder %s139, %s141
      %p148 = scmp.eq.s32.totalorder %s26, 1
      %p149 = por %p147, %p148
      %p150 = scmp.ne.s32.totalorder %s141, %s142
      %p151 = scmp.eq.s32.totalorder %s26, 0
      %p152 = por %p150, %p151
      %p153 = scmp.ne.s32.totalorder %s141, %s142
      %p154 = scmp.eq.s32.totalorder %s27, 1
      %p155 = por %p153, %p154
      %p157 = scmp.ne.s32.totalorder %s142, %s156
      %p158 = scmp.eq.s32.totalorder %s27, 0
      %p159 = por %p157, %p158
      %s161 = sadd.s32 %s160, 1
      %p164 = scmp.eq.s32.totalorder %s21, 1
      %p165 = scmp.ne.s32.totalorder %s160, %s162
      %p166 = scmp.eq.s32.totalorder %s21, 0
      %p167 = por %p165, %p166
      %p168 = scmp.ne.s32.totalorder %s160, %s162
      %p169 = scmp.eq.s32.totalorder %s26, 1
      %p170 = por %p168, %p169
      %p171 = scmp.ne.s32.totalorder %s162, %s163
      %p172 = scmp.eq.s32.totalorder %s26, 0
      %p173 = por %p171, %p172
      %p174 = scmp.ne.s32.totalorder %s162, %s163
      %p175 = scmp.eq.s32.totalorder %s27, 1
      %p176 = por %p174, %p175
      %p178 = scmp.ne.s32.totalorder %s163, %s177
      %p179 = scmp.eq.s32.totalorder %s27, 0
      %p180 = por %p178, %p179
      %s181 = ssub.s32 %s21, %s28
      %p182 = scmp.eq.s32.totalorder %s181, 0
      %s184 = sadd.s32 %s183, 1
      %s185 = scalar_select %p182, %s183, %s184
      %p188 = pneg %p182
      %p189 = scmp.eq.s32.totalorder %s21, 1
      %p190 = por %p188, %p189
      %p191 = scmp.ne.s32.totalorder %s183, %s186
      %p192 = scmp.eq.s32.totalorder %s21, 0
      %p193 = por %p191, %p192
      %p194 = scmp.ne.s32.totalorder %s183, %s186
      %p195 = scmp.eq.s32.totalorder %s26, 1
      %p196 = por %p194, %p195
      %p197 = scmp.ne.s32.totalorder %s186, %s187
      %p198 = scmp.eq.s32.totalorder %s26, 0
      %p199 = por %p197, %p198
      %p200 = scmp.ne.s32.totalorder %s186, %s187
      %p201 = scmp.eq.s32.totalorder %s27, 1
      %p202 = por %p200, %p201
      %p204 = scmp.ne.s32.totalorder %s187, %s203
      %p205 = scmp.eq.s32.totalorder %s27, 0
      %p206 = por %p204, %p205
      %p207 = scmp.le.s32.totalorder 1, %s21
      %p208 = scmp.lt.s32.totalorder %s21, 3
      %p209 = pnand %p207, %p208
      %p210 = pneg %p209
      // Predicated region
      $region9: #{tpu_custom_call.1} parent=5 // pred_check
        _
      $region10: #{tpu_custom_call.1} parent=5 // pred_check_branch
        %212 = sbr.rel (%p209) target = $region12
      $region11: #{tpu_custom_call.1} parent=5 // pred_region
        %s213 = ssub.s32 %s21, 1
        // Predicated region
        $region13: #{tpu_custom_call.1} parent=11 // pred_check
          %p214 = pneg %p68
        $region14: #{tpu_custom_call.1} parent=11 // pred_check_branch
          %216 = sbr.rel (%p214) target = $region16
        $region15: #{tpu_custom_call.1} parent=11 // pred_region
          %s218 = ssub.s32 512, 512
          %219 = vsyncadd [#allocation6], %s218
          %s220 = sshll.u32 [#allocation5], 4
          %s221 = int_to_ptr.vmem [resolvable:$true] %s220
          %226 = dma.hbm_to_vmem [thread:$0]  %s1, 512, %s221, [#allocation6], 128, 128, 8
        $region16: #{tpu_custom_call.1} parent=11 // pred_fallthru
          _
        // Predicated region
        $region17: #{tpu_custom_call.1} parent=11 // pred_check
          %p227 = pneg %p89
        $region18: #{tpu_custom_call.1} parent=11 // pred_check_branch
          %229 = sbr.rel (%p227) target = $region20
        $region19: #{tpu_custom_call.1} parent=11 // pred_region
          _
        $region20: #{tpu_custom_call.1} parent=11 // pred_fallthru
          _
        // Predicated region
        $region21: #{tpu_custom_call.1} parent=11 // pred_check
          %p230 = pneg %p110
        $region22: #{tpu_custom_call.1} parent=11 // pred_check_branch
          %232 = sbr.rel (%p230) target = $region24
        $region23: #{tpu_custom_call.1} parent=11 // pred_region
          %s234 = ssub.s32 1024, 1024
          %235 = vsyncadd [#allocation6], %s234
          %s236 = sshll.u32 [#allocation7], 4
          %s237 = int_to_ptr.vmem [resolvable:$true] %s236
          %242 = dma.hbm_to_vmem [thread:$0]  %s3, 1024, %s237, [#allocation6], 128, 128, 8
        $region24: #{tpu_custom_call.1} parent=11 // pred_fallthru
          _
        // Predicated region
        $region25: #{tpu_custom_call.1} parent=11 // pred_check
          %p243 = pneg %p131
        $region26: #{tpu_custom_call.1} parent=11 // pred_check_branch
          %245 = sbr.rel (%p243) target = $region28
        $region27: #{tpu_custom_call.1} parent=11 // pred_region
          _
        $region28: #{tpu_custom_call.1} parent=11 // pred_fallthru
          _
        // Predicated region
        $region29: #{tpu_custom_call.1} parent=11 // pred_check
          %p246 = pneg %p152
        $region30: #{tpu_custom_call.1} parent=11 // pred_check_branch
          %248 = sbr.rel (%p246) target = $region32
        $region31: #{tpu_custom_call.1} parent=11 // pred_region
          %s250 = ssub.s32 1024, 1024
          %251 = vsyncadd [#allocation9], %s250
          %s252 = sshll.u32 [#allocation8], 4
          %s253 = int_to_ptr.vmem [resolvable:$true] %s252
          %258 = dma.hbm_to_vmem [thread:$0]  %s5, 1024, %s253, [#allocation9], 128, 128, 8
        $region32: #{tpu_custom_call.1} parent=11 // pred_fallthru
          _
        // Predicated region
        $region33: #{tpu_custom_call.1} parent=11 // pred_check
          %p259 = pneg %p173
        $region34: #{tpu_custom_call.1} parent=11 // pred_check_branch
          %261 = sbr.rel (%p259) target = $region36
        $region35: #{tpu_custom_call.1} parent=11 // pred_region
          _
        $region36: #{tpu_custom_call.1} parent=11 // pred_fallthru
          _
      $region12: #{tpu_custom_call.1} parent=5 // pred_fallthru
        _
      %p262 = scmp.lt.s32.totalorder %s21, 2
      // Predicated region
      $region37: #{tpu_custom_call.1} parent=5 // pred_check
        %p263 = pneg %p262
      $region38: #{tpu_custom_call.1} parent=5 // pred_check_branch
        %265 = sbr.rel (%p263) target = $region40
      $region39: #{tpu_custom_call.1} parent=5 // pred_region
        // Predicated region
        $region41: #{tpu_custom_call.1} parent=39 // pred_check
          %p266 = pneg %p41
        $region42: #{tpu_custom_call.1} parent=39 // pred_check_branch
          %268 = sbr.rel (%p266) target = $region44
        $region43: #{tpu_custom_call.1} parent=39 // pred_region
          %s269 = sand.u32 %s31, 1
          %s270 = scalar_lea.sflag [#allocation3], %s269
          %s271 = sand.u32 %s31, 1
          %s272 = smul.addr %s271, 8
          %s273 = scalar_lea.vmem [#allocation2], %s272
          %s275 = ssub.s32 128, 128
          %276 = vsyncadd %s270, %s275
          %s277 = smul.addr %s21, 128
          %s278 = scalar_lea.hbm %s0, %s277
          %s280 = sshll.u32 %s273, 4
          %s281 = int_to_ptr.vmem [resolvable:$true] %s280
          %283 = dma.hbm_to_vmem [thread:$0]  %s278, 128, %s281, %s270
        $region44: #{tpu_custom_call.1} parent=39 // pred_fallthru
          _
      $region40: #{tpu_custom_call.1} parent=5 // pred_fallthru
        _
      %p284 = scmp.le.s32.totalorder 1, %s21
      %p285 = scmp.lt.s32.totalorder %s21, 3
      %p286 = pnand %p284, %p285
      %p287 = pneg %p286
      // Predicated region
      $region45: #{tpu_custom_call.1} parent=5 // pred_check
        _
      $region46: #{tpu_custom_call.1} parent=5 // pred_check_branch
        %289 = sbr.rel (%p286) target = $region48
      $region47: #{tpu_custom_call.1} parent=5 // pred_region
        %s290 = ssub.s32 %s21, 1
        %s291 = sand.u32 %s34, 1
        %s292 = scalar_lea.sflag [#allocation3], %s291
        %s293 = sand.u32 %s34, 1
        %s294 = smul.addr %s293, 8
        %s295 = scalar_lea.vmem [#allocation2], %s294
        // Predicated region
        $region49: #{tpu_custom_call.1} parent=47 // pred_check
          %p296 = pneg %p47
        $region50: #{tpu_custom_call.1} parent=47 // pred_check_branch
          %298 = sbr.rel (%p296) target = $region52
        $region51: #{tpu_custom_call.1} parent=47 // pred_region
          %299 = dma.done %s292, 128
        $region52: #{tpu_custom_call.1} parent=47 // pred_fallthru
          _
        // Predicated region
        $region53: #{tpu_custom_call.1} parent=47 // pred_check
          %p300 = pneg %p68
        $region54: #{tpu_custom_call.1} parent=47 // pred_check_branch
          %302 = sbr.rel (%p300) target = $region56
        $region55: #{tpu_custom_call.1} parent=47 // pred_region
          %303 = dma.done [#allocation6], 512
        $region56: #{tpu_custom_call.1} parent=47 // pred_fallthru
          _
        // Predicated region
        $region57: #{tpu_custom_call.1} parent=47 // pred_check
          %p304 = pneg %p110
        $region58: #{tpu_custom_call.1} parent=47 // pred_check_branch
          %306 = sbr.rel (%p304) target = $region60
        $region59: #{tpu_custom_call.1} parent=47 // pred_region
          %307 = dma.done [#allocation6], 1024
        $region60: #{tpu_custom_call.1} parent=47 // pred_fallthru
          _
        // Predicated region
        $region61: #{tpu_custom_call.1} parent=47 // pred_check
          %p308 = pneg %p152
        $region62: #{tpu_custom_call.1} parent=47 // pred_check_branch
          %310 = sbr.rel (%p308) target = $region64
        $region63: #{tpu_custom_call.1} parent=47 // pred_region
          %311 = dma.done [#allocation9], 1024
        $region64: #{tpu_custom_call.1} parent=47 // pred_fallthru
          _
        %s312 = sand.u32 %s34, 1
        %s313 = scalar_lea.sflag [#allocation3], %s312
        %s314 = sand.u32 %s34, 1
        %s315 = smul.addr %s314, 8
        %s316 = scalar_lea.vmem [#allocation2], %s315
        %p317 = pneg %p47
        %p318 = pneg %p44
        %p319 = pneg %p68
        %p320 = pneg %p65
        %p321 = pneg %p89
        %p322 = pneg %p86
        %p323 = pneg %p110
        %p324 = pneg %p107
        %p325 = pneg %p131
        %p326 = pneg %p128
        %p327 = pneg %p152
        %p328 = pneg %p149
        %p329 = pneg %p173
        %p330 = pneg %p170
        %p331 = pneg %p199
        %p332 = pneg %p196
        %s333 = sand.u32 %s186, 1
        %s334 = scalar_lea.sflag [#allocation4], %s333
        %s335 = sand.u32 %s186, 1
        %s336 = smul.addr %s335, 8
        %s337 = scalar_lea.vmem [#allocation10], %s336
        %v338 = vld [vmem:[%s295] sm:$0xff]
        %v339 = vld [vmem:[#allocation5] sm:$0xff]
        %v340 = vld [vmem:[#allocation5 + $0x8] sm:$0xff]
        %v341 = vld [vmem:[#allocation5 + $0x10] sm:$0xff]
        %v342 = vld [vmem:[#allocation5 + $0x18] sm:$0xff]
        %v343 = vld [vmem:[%s2] sm:$0x1]
        %v345 = vlaneseq
        %v346 = vshrl.u32 %v345, 7
        %v347 = vsub.s32 0, %v346
        %v348 = vrot.slane %v343, %v347
        %vm350 = vcmask 261120
        %v352 = vsel %vm350, %v338, 0
        %354 = vmatprep.subr.mxu0 0.0
        %355 = vmatpush1.msra.mxu0 %v339
        %356 = vmatprep.subr.mxu0 0.0
        %357 = vmatpush1.msra.mxu0 %v340
        %358 = vmatprep.subr.mxu0 0.0
        %359 = vmatpush1.msra.mxu0 %v341
        %360 = vmatprep.subr.mxu0 0.0
        %361 = vmatpush1.msra.mxu0 %v342
        %362 = vmatprep.subr.mxu0 0.0
        %363 = vmatpush1.msra.mxu0 0.0
        %364 = vmatprep.subr.mxu0 0.0
        %365 = vmatpush1.msra.mxu0 0.0
        %366 = vmatprep.subr.mxu0 0.0
        %367 = vmatpush1.msra.mxu0 0.0
        %368 = vmatprep.subr.mxu0 0.0
        %369 = vmatpush1.msra.mxu0 0.0
        %370 = vmatprep.subr.mxu0 0.0
        %371 = vmatpush1.msra.mxu0 0.0
        %372 = vmatprep.subr.mxu0 0.0
        %373 = vmatpush1.msra.mxu0 0.0
        %374 = vmatprep.subr.mxu0 0.0
        %375 = vmatpush1.msra.mxu0 0.0
        %376 = vmatprep.subr.mxu0 0.0
        %377 = vmatpush1.msra.mxu0 0.0
        %378 = vmatprep.subr.mxu0 0.0
        %379 = vmatpush1.msra.mxu0 0.0
        %380 = vmatprep.subr.mxu0 0.0
        %381 = vmatpush1.msra.mxu0 0.0
        %382 = vmatprep.subr.mxu0 0.0
        %383 = vmatpush1.msra.mxu0 0.0
        %384 = vmatprep.subr.mxu0 0.0
        %385 = vmatpush1.msra.mxu0 0.0
        %386 = vmatprep.subr.mxu0 0.0
        %387 = vmatpush1.msra.mxu0 0.0
        %388 = vmatprep.subr.mxu0 0.0
        %389 = vmatpush1.msra.mxu0 0.0
        %390 = vmatprep.subr.mxu0 0.0
        %391 = vmatpush1.msra.mxu0 0.0
        %392 = vmatprep.subr.mxu0 0.0
        %393 = vmatpush1.msra.mxu0 0.0
        %394 = vmatprep.subr.mxu0 0.0
        %395 = vmatpush1.msra.mxu0 0.0
        %396 = vmatprep.subr.mxu0 0.0
        %397 = vmatpush1.msra.mxu0 0.0
        %398 = vmatprep.subr.mxu0 0.0
        %399 = vmatpush1.msra.mxu0 0.0
        %400 = vmatprep.subr.mxu0 0.0
        %401 = vmatpush1.msra.mxu0 0.0
        %402 = vmatprep.subr.mxu0 0.0
        %403 = vmatpush1.msra.mxu0 0.0
        %404 = vmatprep.subr.mxu0 0.0
        %405 = vmatpush1.msra.mxu0 0.0
        %406 = vmatprep.subr.mxu0 0.0
        %407 = vmatpush1.msra.mxu0 0.0
        %408 = vmatprep.subr.mxu0 0.0
        %409 = vmatpush1.msra.mxu0 0.0
        %410 = vmatprep.subr.mxu0 0.0
        %411 = vmatpush1.msra.mxu0 0.0
        %412 = vmatprep.subr.mxu0 0.0
        %413 = vmatpush1.msra.mxu0 0.0
        %414 = vmatprep.subr.mxu0 0.0
        %415 = vmatpush1.msra.mxu0 0.0
        %416 = vmatprep.subr.mxu0 0.0
        %417 = vmatpush1.msra.mxu0 0.0
        %418 = vmatprep.mubr.f32.mxu0 0.0
        %419 = vmatmul.mubr.f32.gmra.mrb[0].mxu0 %v352
        %v420 = vpop.f32.mrb[0].mxu0
        %v421 = vadd.f32 %v348, %v420
        %v422 = vpop.f32.mrb[0].mxu0
        %423 = vdwg.mxu0
        %v424 = vmul.f32 %v421, 0.5
        %v425 = vrcp.pop 1.4142135
        %v426 = vmul.f32 %v421, %v425
        %v427 = vand.u32 2147483647, %v426
        %v428 = vmul.f32 %v427, 0.3275911
        %v429 = vadd.f32 %v428, 1.0
        %v430 = vrcp.pop %v429
        %v431 = vmul.f32 1.0, %v430
        %v432 = vmul.f32 %v431, 1.0614054
        %v433 = vadd.f32 %v432, -1.4531521
        %v434 = vmul.f32 %v433, %v431
        %v435 = vadd.f32 %v434, 1.4214138
        %v436 = vmul.f32 %v435, %v431
        %v437 = vadd.f32 %v436, -0.28449672
        %v438 = vmul.f32 %v437, %v431
        %v439 = vadd.f32 %v438, 0.2548296
        %v440 = vmul.f32 %v439, %v431
        %v441 = vsub.f32 0.0, %v427
        %v442 = vmul.f32 %v441, %v427
        %v443 = vmul.f32 %v442, 1.442695
        %v444 = vpow.pop %v443
        %v445 = vmul.f32 %v440, %v444
        %v446 = vsub.f32 1.0, %v445
        %vm447 = vcmp.ge.f32.partialorder %v426, 0.0
        %v448 = vsub.f32 0.0, %v446
        %v449 = vsel %vm447, %v446, %v448
        %v450 = vadd.f32 %v449, 1.0
        %v451 = vmul.f32 %v424, %v450
        %v452 = vld [vmem:[#allocation7] sm:$0xff]
        %v453 = vld [vmem:[#allocation7 + $0x8] sm:$0xff]
        %v454 = vld [vmem:[#allocation7 + $0x10] sm:$0xff]
        %v455 = vld [vmem:[#allocation7 + $0x18] sm:$0xff]
        %v456 = vld [vmem:[#allocation7 + $0x20] sm:$0xff]
        %v457 = vld [vmem:[#allocation7 + $0x28] sm:$0xff]
        %v458 = vld [vmem:[#allocation7 + $0x30] sm:$0xff]
        %v459 = vld [vmem:[#allocation7 + $0x38] sm:$0xff]
        %v460 = vld [vmem:[%s4] sm:$0x1]
        %v462 = vlaneseq
        %v463 = vshrl.u32 %v462, 7
        %v464 = vsub.s32 0, %v463
        %v465 = vrot.slane %v460, %v464
        %vm467 = vcmask 523264
        %v469 = vsel %vm467, %v451, 0
        %471 = vmatprep.subr.mxu0 0.0
        %472 = vmatpush1.msra.mxu0 %v452
        %473 = vmatprep.subr.mxu0 0.0
        %474 = vmatpush1.msra.mxu0 %v453
        %475 = vmatprep.subr.mxu0 0.0
        %476 = vmatpush1.msra.mxu0 %v454
        %477 = vmatprep.subr.mxu0 0.0
        %478 = vmatpush1.msra.mxu0 %v455
        %479 = vmatprep.subr.mxu0 0.0
        %480 = vmatpush1.msra.mxu0 %v456
        %481 = vmatprep.subr.mxu0 0.0
        %482 = vmatpush1.msra.mxu0 %v457
        %483 = vmatprep.subr.mxu0 0.0
        %484 = vmatpush1.msra.mxu0 %v458
        %485 = vmatprep.subr.mxu0 0.0
        %486 = vmatpush1.msra.mxu0 %v459
        %487 = vmatprep.subr.mxu0 0.0
        %488 = vmatpush1.msra.mxu0 0.0
        %489 = vmatprep.subr.mxu0 0.0
        %490 = vmatpush1.msra.mxu0 0.0
        %491 = vmatprep.subr.mxu0 0.0
        %492 = vmatpush1.msra.mxu0 0.0
        %493 = vmatprep.subr.mxu0 0.0
        %494 = vmatpush1.msra.mxu0 0.0
        %495 = vmatprep.subr.mxu0 0.0
        %496 = vmatpush1.msra.mxu0 0.0
        %497 = vmatprep.subr.mxu0 0.0
        %498 = vmatpush1.msra.mxu0 0.0
        %499 = vmatprep.subr.mxu0 0.0
        %500 = vmatpush1.msra.mxu0 0.0
        %501 = vmatprep.subr.mxu0 0.0
        %502 = vmatpush1.msra.mxu0 0.0
        %503 = vmatprep.subr.mxu0 0.0
        %504 = vmatpush1.msra.mxu0 0.0
        %505 = vmatprep.subr.mxu0 0.0
        %506 = vmatpush1.msra.mxu0 0.0
        %507 = vmatprep.subr.mxu0 0.0
        %508 = vmatpush1.msra.mxu0 0.0
        %509 = vmatprep.subr.mxu0 0.0
        %510 = vmatpush1.msra.mxu0 0.0
        %511 = vmatprep.subr.mxu0 0.0
        %512 = vmatpush1.msra.mxu0 0.0
        %513 = vmatprep.subr.mxu0 0.0
        %514 = vmatpush1.msra.mxu0 0.0
        %515 = vmatprep.subr.mxu0 0.0
        %516 = vmatpush1.msra.mxu0 0.0
        %517 = vmatprep.subr.mxu0 0.0
        %518 = vmatpush1.msra.mxu0 0.0
        %519 = vmatprep.subr.mxu0 0.0
        %520 = vmatpush1.msra.mxu0 0.0
        %521 = vmatprep.subr.mxu0 0.0
        %522 = vmatpush1.msra.mxu0 0.0
        %523 = vmatprep.subr.mxu0 0.0
        %524 = vmatpush1.msra.mxu0 0.0
        %525 = vmatprep.subr.mxu0 0.0
        %526 = vmatpush1.msra.mxu0 0.0
        %527 = vmatprep.subr.mxu0 0.0
        %528 = vmatpush1.msra.mxu0 0.0
        %529 = vmatprep.subr.mxu0 0.0
        %530 = vmatpush1.msra.mxu0 0.0
        %531 = vmatprep.subr.mxu0 0.0
        %532 = vmatpush1.msra.mxu0 0.0
        %533 = vmatprep.subr.mxu0 0.0
        %534 = vmatpush1.msra.mxu0 0.0
        %535 = vmatprep.mubr.f32.mxu0 0.0
        %536 = vmatmul.mubr.f32.gmra.mrb[0].mxu0 %v469
        %v537 = vpop.f32.mrb[0].mxu0
        %v538 = vadd.f32 %v465, %v537
        %v539 = vpop.f32.mrb[0].mxu0
        %540 = vdwg.mxu0
        %v541 = vmul.f32 %v538, 0.5
        %v542 = vmul.f32 %v538, %v425
        %v543 = vand.u32 2147483647, %v542
        %v544 = vmul.f32 %v543, 0.3275911
        %v545 = vadd.f32 %v544, 1.0
        %v546 = vrcp.pop %v545
        %v547 = vmul.f32 1.0, %v546
        %v548 = vmul.f32 %v547, 1.0614054
        %v549 = vadd.f32 %v548, -1.4531521
        %v550 = vmul.f32 %v549, %v547
        %v551 = vadd.f32 %v550, 1.4214138
        %v552 = vmul.f32 %v551, %v547
        %v553 = vadd.f32 %v552, -0.28449672
        %v554 = vmul.f32 %v553, %v547
        %v555 = vadd.f32 %v554, 0.2548296
        %v556 = vmul.f32 %v555, %v547
        %v557 = vsub.f32 0.0, %v543
        %v558 = vmul.f32 %v557, %v543
        %v559 = vmul.f32 %v558, 1.442695
        %v560 = vpow.pop %v559
        %v561 = vmul.f32 %v556, %v560
        %v562 = vsub.f32 1.0, %v561
        %vm563 = vcmp.ge.f32.partialorder %v542, 0.0
        %v564 = vsub.f32 0.0, %v562
        %v565 = vsel %vm563, %v562, %v564
        %v566 = vadd.f32 %v565, 1.0
        %v567 = vmul.f32 %v541, %v566
        %v568 = vld [vmem:[#allocation8] sm:$0xff]
        %v569 = vld [vmem:[#allocation8 + $0x8] sm:$0xff]
        %v570 = vld [vmem:[#allocation8 + $0x10] sm:$0xff]
        %v571 = vld [vmem:[#allocation8 + $0x18] sm:$0xff]
        %v572 = vld [vmem:[#allocation8 + $0x20] sm:$0xff]
        %v573 = vld [vmem:[#allocation8 + $0x28] sm:$0xff]
        %v574 = vld [vmem:[#allocation8 + $0x30] sm:$0xff]
        %v575 = vld [vmem:[#allocation8 + $0x38] sm:$0xff]
        %v576 = vld [vmem:[%s6] sm:$0x1]
        %v578 = vlaneseq
        %v579 = vshrl.u32 %v578, 7
        %v580 = vsub.s32 0, %v579
        %v581 = vrot.slane %v576, %v580
        %v584 = vsel %vm467, %v567, 0
        %586 = vmatprep.subr.mxu0 0.0
        %587 = vmatpush1.msra.mxu0 %v568
        %588 = vmatprep.subr.mxu0 0.0
        %589 = vmatpush1.msra.mxu0 %v569
        %590 = vmatprep.subr.mxu0 0.0
        %591 = vmatpush1.msra.mxu0 %v570
        %592 = vmatprep.subr.mxu0 0.0
        %593 = vmatpush1.msra.mxu0 %v571
        %594 = vmatprep.subr.mxu0 0.0
        %595 = vmatpush1.msra.mxu0 %v572
        %596 = vmatprep.subr.mxu0 0.0
        %597 = vmatpush1.msra.mxu0 %v573
        %598 = vmatprep.subr.mxu0 0.0
        %599 = vmatpush1.msra.mxu0 %v574
        %600 = vmatprep.subr.mxu0 0.0
        %601 = vmatpush1.msra.mxu0 %v575
        %602 = vmatprep.subr.mxu0 0.0
        %603 = vmatpush1.msra.mxu0 0.0
        %604 = vmatprep.subr.mxu0 0.0
        %605 = vmatpush1.msra.mxu0 0.0
        %606 = vmatprep.subr.mxu0 0.0
        %607 = vmatpush1.msra.mxu0 0.0
        %608 = vmatprep.subr.mxu0 0.0
        %609 = vmatpush1.msra.mxu0 0.0
        %610 = vmatprep.subr.mxu0 0.0
        %611 = vmatpush1.msra.mxu0 0.0
        %612 = vmatprep.subr.mxu0 0.0
        %613 = vmatpush1.msra.mxu0 0.0
        %614 = vmatprep.subr.mxu0 0.0
        %615 = vmatpush1.msra.mxu0 0.0
        %616 = vmatprep.subr.mxu0 0.0
        %617 = vmatpush1.msra.mxu0 0.0
        %618 = vmatprep.subr.mxu0 0.0
        %619 = vmatpush1.msra.mxu0 0.0
        %620 = vmatprep.subr.mxu0 0.0
        %621 = vmatpush1.msra.mxu0 0.0
        %622 = vmatprep.subr.mxu0 0.0
        %623 = vmatpush1.msra.mxu0 0.0
        %624 = vmatprep.subr.mxu0 0.0
        %625 = vmatpush1.msra.mxu0 0.0
        %626 = vmatprep.subr.mxu0 0.0
        %627 = vmatpush1.msra.mxu0 0.0
        %628 = vmatprep.subr.mxu0 0.0
        %629 = vmatpush1.msra.mxu0 0.0
        %630 = vmatprep.subr.mxu0 0.0
        %631 = vmatpush1.msra.mxu0 0.0
        %632 = vmatprep.subr.mxu0 0.0
        %633 = vmatpush1.msra.mxu0 0.0
        %634 = vmatprep.subr.mxu0 0.0
        %635 = vmatpush1.msra.mxu0 0.0
        %636 = vmatprep.subr.mxu0 0.0
        %637 = vmatpush1.msra.mxu0 0.0
        %638 = vmatprep.subr.mxu0 0.0
        %639 = vmatpush1.msra.mxu0 0.0
        %640 = vmatprep.subr.mxu0 0.0
        %641 = vmatpush1.msra.mxu0 0.0
        %642 = vmatprep.subr.mxu0 0.0
        %643 = vmatpush1.msra.mxu0 0.0
        %644 = vmatprep.subr.mxu0 0.0
        %645 = vmatpush1.msra.mxu0 0.0
        %646 = vmatprep.subr.mxu0 0.0
        %647 = vmatpush1.msra.mxu0 0.0
        %648 = vmatprep.subr.mxu0 0.0
        %649 = vmatpush1.msra.mxu0 0.0
        %650 = vmatprep.mubr.f32.mxu0 0.0
        %651 = vmatmul.mubr.f32.gmra.mrb[0].mxu0 %v584
        %v652 = vpop.f32.mrb[0].mxu0
        %v653 = vadd.f32 %v581, %v652
        %v654 = vpop.f32.mrb[0].mxu0
        %655 = vdwg.mxu0
        %v656 = vmul.f32 %v653, %v653
        %657 = vadd.xlane.f32.xlu0 %v656
        %v658 = vpop.xlane.xlu0 %657
        %v659 = vmax.f32 %v658, 1e-24
        %v660 = vrsqrt.pop %v659
        %v661 = vmul.f32 %v653, %v660
        %662 = vst [vmem:[%s337] sm:$0xff] %v661
        %s663 = sand.u32 %s186, 1
        %s664 = scalar_lea.sflag [#allocation4], %s663
        %s665 = sand.u32 %s186, 1
        %s666 = smul.addr %s665, 8
        %s667 = scalar_lea.vmem [#allocation10], %s666
        // Predicated region
        $region65: #{tpu_custom_call.1} parent=47 // pred_check
          %p668 = pneg %p196
        $region66: #{tpu_custom_call.1} parent=47 // pred_check_branch
          %670 = sbr.rel (%p668) target = $region68
        $region67: #{tpu_custom_call.1} parent=47 // pred_region
          %s672 = ssub.s32 128, 128
          %673 = vsyncadd %s664, %s672
          %s674 = smul.addr %s26, 128
          %s675 = scalar_lea.hbm %s7, %s674
          %s677 = sshll.u32 %s667, 4
          %s678 = int_to_ptr.vmem [resolvable:$true] %s677
          %680 = dma.vmem_to_hbm [thread:$0]  %s678, 128, %s675, %s664
        $region68: #{tpu_custom_call.1} parent=47 // pred_fallthru
          _
      $region48: #{tpu_custom_call.1} parent=5 // pred_fallthru
        _
      %p681 = scmp.le.s32.totalorder 2, %s21
      // Predicated region
      $region69: #{tpu_custom_call.1} parent=5 // pred_check
        %p682 = pneg %p681
      $region70: #{tpu_custom_call.1} parent=5 // pred_check_branch
        %684 = sbr.rel (%p682) target = $region72
      $region71: #{tpu_custom_call.1} parent=5 // pred_region
        %s685 = ssub.s32 %s21, 2
        // Predicated region
        $region73: #{tpu_custom_call.1} parent=71 // pred_check
          %p686 = pneg %p202
        $region74: #{tpu_custom_call.1} parent=71 // pred_check_branch
          %688 = sbr.rel (%p686) target = $region76
        $region75: #{tpu_custom_call.1} parent=71 // pred_region
          %s689 = sand.u32 %s187, 1
          %s690 = scalar_lea.sflag [#allocation4], %s689
          %s691 = sand.u32 %s187, 1
          %s692 = smul.addr %s691, 8
          %s693 = scalar_lea.vmem [#allocation10], %s692
          %694 = dma.done %s690, 128
        $region76: #{tpu_custom_call.1} parent=71 // pred_fallthru
          _
      $region72: #{tpu_custom_call.1} parent=5 // pred_fallthru
        _
    $region6: #{tpu_custom_call.1} parent=1 // loop_footer
      %s25 = sadd.s32 1, %s21
    $region7: #{tpu_custom_call.1} parent=1 // loop_footer_branch
      %20 = sbr.rel target = $region3
    $region8: #{tpu_custom_call.1} parent=1 // loop_exit
      _
    %695 = vsyncpa [#allocation3], 1
    %s696 = scalar_lea.sflag [#allocation3], 1
    %697 = vsyncpa %s696, 1
    %698 = vsyncpa [#allocation6], 1
    %699 = vsyncpa [#allocation9], 1
    %700 = vsyncpa [#allocation4], 1
    %s701 = scalar_lea.sflag [#allocation4], 1
    %702 = vsyncpa %s701, 1

</llo_original>
